<compile_context>
chip_gen: v5e
topology: v5e:2x2
jax: 0.10.0
libtpu: 0.0.40
codegen_flags: <defaults>
</compile_context>

<pallas_src>
import functools
import math

import jax
import jax.numpy as jnp
from jax.experimental import pallas as pl
from jax.experimental.pallas import tpu as pltpu


# --------------------------------------------------------------------------- #
# Kernels
# --------------------------------------------------------------------------- #
def _ln_kernel_affine(x_ref, alpha_ref, beta_ref, o_ref, *, epsilon, n_true):
    x = x_ref[...].astype(jnp.float32)                    # (TB, Fp)
    n = jnp.float32(n_true)
    # Single-pass fused reduction: sum and sum-of-squares per row. Zero-padded
    # feature columns (if any) contribute 0 to both, so dividing by the true
    # feature count keeps mean/var exact.
    s = jnp.sum(x, axis=1, keepdims=True)                 # (TB, 1)
    sq = jnp.sum(x * x, axis=1, keepdims=True)            # (TB, 1)
    mean = s / n
    var = (sq - n * mean * mean) / (n - 1.0)              # unbiased (torch.var)
    var = jnp.maximum(var, 0.0)                           # guard cancellation
    inv = jax.lax.rsqrt(var + jnp.float32(epsilon))       # per-row, EUP slot
    y = (x - mean) * inv
    alpha = alpha_ref[...].astype(jnp.float32)            # (1, Fp) broadcast
    beta = beta_ref[...].astype(jnp.float32)
    o_ref[...] = (alpha * y + beta).astype(o_ref.dtype)


def _ln_kernel_plain(x_ref, o_ref, *, epsilon, n_true):
    x = x_ref[...].astype(jnp.float32)                    # (TB, Fp)
    n = jnp.float32(n_true)
    s = jnp.sum(x, axis=1, keepdims=True)
    sq = jnp.sum(x * x, axis=1, keepdims=True)
    mean = s / n
    var = (sq - n * mean * mean) / (n - 1.0)
    var = jnp.maximum(var, 0.0)
    inv = jax.lax.rsqrt(var + jnp.float32(epsilon))
    o_ref[...] = ((x - mean) * inv).astype(o_ref.dtype)


# --------------------------------------------------------------------------- #
# Tiling helpers
# --------------------------------------------------------------------------- #
def _round_up(a, m):
    return ((a + m - 1) // m) * m


def _sublane_multiple(dtype):
    itemsize = jnp.dtype(dtype).itemsize
    return {4: 8, 2: 16, 1: 32}.get(itemsize, 8)


def _vmem_params():
    """(per_buffer_target_bytes, vmem_limit_bytes) keyed off VMEM capacity."""
    cap = 128 * 1024 * 1024
    try:
        info = pltpu.get_tpu_info()
        cap = int(getattr(info, "vmem_capacity_bytes", cap) or cap)
    except Exception:
        pass
    if cap <= 64 * 1024 * 1024:
        # v7x-class: 64 MiB physical. 2x in + 2x out ~ 32 MiB + f32 temps.
        return 8 * 1024 * 1024, 48 * 1024 * 1024
    # v5e/v6e-class: 128 MiB physical; measured diminishing returns past ~4 MiB
    # so keep the same 8 MiB target but allow more scoped VMEM headroom.
    return 8 * 1024 * 1024, 64 * 1024 * 1024


def _pick_batch_tile(b, f_pad, dtype, target_bytes):
    """Rows per block, sized against the f32-expanded in-kernel footprint."""
    sl = _sublane_multiple(dtype)
    if b <= sl:
        return b                                   # full-extent block (legal)
    bytes_per_row = max(1, f_pad) * 4              # f32-expanded
    tb = max(sl, min(8192, target_bytes // bytes_per_row))
    # Guarantee >= 2 grid steps so 'parallel' can shard across both v7x cores.
    half_up = _round_up((b + 1) // 2, sl)
    tb = min(tb, half_up)
    tb = max(sl, (tb // sl) * sl)                  # sublane-aligned
    return tb


# --------------------------------------------------------------------------- #
# Wrapper
# --------------------------------------------------------------------------- #
def layer_norm_pallas(x, alpha=None, beta=None, *, epsilon=1e-6, learnable=True):
    """x: any shape with a leading batch dim; flattened per-row like the torch module."""
    orig_shape = x.shape
    b = x.shape[0]
    x2 = x.reshape(b, -1)                          # (B, F)
    f = x2.shape[1]
    itemsize = jnp.dtype(x2.dtype).itemsize

    # Lane-dense feature padding (zero pad -> sums unchanged, divisor stays f).
    # Only worth the extra HBM pass when F is already >= one full lane group.
    f_pad = _round_up(f, 128) if (f >= 128 and f % 128 != 0) else f
    if f_pad != f:
        x2 = jnp.pad(x2, ((0, 0), (0, f_pad - f)))

    target_bytes, vmem_limit = _vmem_params()
    tb = _pick_batch_tile(b, f_pad, x2.dtype, target_bytes)
    n_tiles = pl.cdiv(b, tb)                       # partial last block OK

    # Rough VMEM footprint check: 2x in + 2x out double buffers + f32 temps.
    est = 4 * tb * f_pad * itemsize + 2 * tb * f_pad * 4
    if est > vmem_limit:
        # TODO(synk): split the feature axis across a second 'arbitrary' grid
        # dim with partial-sum scratch instead of failing for huge F.
        raise ValueError(
            f"LayerNorm tile ({tb}x{f_pad}, ~{est >> 20} MiB) exceeds the VMEM "
            f"budget ({vmem_limit >> 20} MiB); feature axis too large.")

    compiler_params = pltpu.CompilerParams(
        dimension_semantics=("parallel",),         # rows independent
        vmem_limit_bytes=vmem_limit,
    )

    x_spec = pl.BlockSpec((tb, f_pad), lambda i: (i, 0))
    o_spec = pl.BlockSpec((tb, f_pad), lambda i: (i, 0))

    if learnable:
        if alpha is None or beta is None:
            raise ValueError("learnable=True requires alpha and beta of shape (1, F)")
        a2 = jnp.asarray(alpha).reshape(1, f)
        b2 = jnp.asarray(beta).reshape(1, f)
        if f_pad != f:
            a2 = jnp.pad(a2, ((0, 0), (0, f_pad - f)))
            b2 = jnp.pad(b2, ((0, 0), (0, f_pad - f)))
        out = pl.pallas_call(
            functools.partial(_ln_kernel_affine, epsilon=epsilon, n_true=f),
            out_shape=jax.ShapeDtypeStruct((b, f_pad), x2.dtype),
            grid_spec=pl.GridSpec(
                grid=(n_tiles,),
                in_specs=[
                    x_spec,
                    pl.BlockSpec((1, f_pad), lambda i: (0, 0)),  # VMEM-resident
                    pl.BlockSpec((1, f_pad), lambda i: (0, 0)),
                ],
                out_specs=o_spec,
            ),
            compiler_params=compiler_params,
        )(x2, a2, b2)
    else:
        out = pl.pallas_call(
            functools.partial(_ln_kernel_plain, epsilon=epsilon, n_true=f),
            out_shape=jax.ShapeDtypeStruct((b, f_pad), x2.dtype),
            grid_spec=pl.GridSpec(
                grid=(n_tiles,),
                in_specs=[x_spec],
                out_specs=o_spec,
            ),
            compiler_params=compiler_params,
        )(x2)

    if f_pad != f:
        out = out[:, :f]
    return out.reshape(orig_shape)


def make_layernorm_params(input_size, key):
    """Deterministic uniform(-std, std) init matching reset_parameters()."""
    std = 1.0 / math.sqrt(input_size)
    ka, kb = jax.random.split(key)
    alpha = jax.random.uniform(ka, (1, input_size), jnp.float32, -std, std)
    beta = jax.random.uniform(kb, (1, input_size), jnp.float32, -std, std)
    return alpha, beta


# --------------------------------------------------------------------------- #
# Demo / self-check
# --------------------------------------------------------------------------- #
if __name__ == "__main__":
    key = jax.random.PRNGKey(0)
    k_x, k_p = jax.random.split(key)

    # small shapes: batch=2, flattened features = 4*8 = 32 (input_size = 32)
    batch, c, s = 2, 4, 8
    input_size = c * s
    x = jax.random.normal(k_x, (batch, c, s), jnp.float32)
    alpha, beta = make_layernorm_params(input_size, k_p)

    # learnable path
    out = layer_norm_pallas(x, alpha, beta, epsilon=1e-6, learnable=True)
    out = jax.block_until_ready(out)

    # non-learnable path (no alpha/beta DMA)
    out_plain = layer_norm_pallas(x, epsilon=1e-6, learnable=False)
    out_plain = jax.block_until_ready(out_plain)

    # reference in plain JAX (unbiased variance, same as torch.var default)
    x2 = x.reshape(batch, -1)
    mean = jnp.mean(x2, axis=1, keepdims=True)
    var = jnp.var(x2, axis=1, keepdims=True, ddof=1)
    norm = (x2 - mean) / jnp.sqrt(var + 1e-6)
    ref = (alpha * norm + beta).reshape(x.shape)
    ref_plain = norm.reshape(x.shape)

    assert jnp.allclose(out, ref, atol=1e-5, rtol=1e-5), "learnable mismatch vs reference"
    assert jnp.allclose(out_plain, ref_plain, atol=1e-5, rtol=1e-5), "plain mismatch vs reference"

    print("KERNEL_OK")
</pallas_src>

<mosaic_0001>
module attributes {stable_mosaic.version = 11 : i64} {
  func.func @_ln_kernel_affine(%arg0: i32, %arg1: memref<2x32xf32, #tpu.memory_space<vmem>>, %arg2: memref<1x32xf32, #tpu.memory_space<vmem>>, %arg3: memref<1x32xf32, #tpu.memory_space<vmem>>, %arg4: memref<2x32xf32, #tpu.memory_space<vmem>>) attributes {dimension_semantics = [#tpu.dimension_semantics<parallel>], iteration_bounds = array<i64: 1>, scalar_prefetch = 0 : i64, scratch_operands = 0 : i64, tpu.core_type = #tpu.core_type<tc>, window_params = [{transform_indices = @transform_0, window_bounds = array<i64: 2, 32>}, {pipeline_mode = #tpu.pipeline_mode<synchronous>, transform_indices = @transform_1, window_bounds = array<i64: 1, 32>}, {pipeline_mode = #tpu.pipeline_mode<synchronous>, transform_indices = @transform_2, window_bounds = array<i64: 1, 32>}, {transform_indices = @transform_3, window_bounds = array<i64: 2, 32>}]} {
    %c0 = arith.constant 0 : index
    %c0_0 = arith.constant 0 : index
    %0 = vector.load %arg1[%c0, %c0_0] : memref<2x32xf32, #tpu.memory_space<vmem>>, vector<2x32xf32>
    %cst = arith.constant dense<0.000000e+00> : vector<2xf32>
    %1 = vector.multi_reduction <add>, %0, %cst [1] : vector<2x32xf32> to vector<2xf32>
    %2 = vector.shape_cast %1 : vector<2xf32> to vector<2x1xf32>
    %3 = arith.mulf %0, %0 : vector<2x32xf32>
    %cst_1 = arith.constant dense<0.000000e+00> : vector<2xf32>
    %4 = vector.multi_reduction <add>, %3, %cst_1 [1] : vector<2x32xf32> to vector<2xf32>
    %5 = vector.shape_cast %4 : vector<2xf32> to vector<2x1xf32>
    %cst_2 = arith.constant 3.200000e+01 : f32
    %6 = vector.broadcast %cst_2 : f32 to vector<2x1xf32>
    %7 = arith.divf %2, %6 : vector<2x1xf32>
    %cst_3 = arith.constant 3.200000e+01 : f32
    %8 = vector.broadcast %cst_3 : f32 to vector<2x1xf32>
    %9 = arith.mulf %8, %7 : vector<2x1xf32>
    %10 = arith.mulf %9, %7 : vector<2x1xf32>
    %11 = arith.subf %5, %10 : vector<2x1xf32>
    %cst_4 = arith.constant 3.200000e+01 : f32
    %cst_5 = arith.constant 1.000000e+00 : f32
    %12 = arith.subf %cst_4, %cst_5 : f32
    %13 = vector.broadcast %12 : f32 to vector<2x1xf32>
    %14 = arith.divf %11, %13 : vector<2x1xf32>
    %cst_6 = arith.constant 0.000000e+00 : f32
    %15 = vector.broadcast %cst_6 : f32 to vector<2x1xf32>
    %16 = arith.maximumf %14, %15 : vector<2x1xf32>
    %cst_7 = arith.constant 9.99999997E-7 : f32
    %17 = vector.broadcast %cst_7 : f32 to vector<2x1xf32>
    %18 = arith.addf %16, %17 : vector<2x1xf32>
    %19 = math.rsqrt %18 : vector<2x1xf32>
    %20 = vector.broadcast %7 : vector<2x1xf32> to vector<2x32xf32>
    %21 = arith.subf %0, %20 : vector<2x32xf32>
    %22 = vector.broadcast %19 : vector<2x1xf32> to vector<2x32xf32>
    %23 = arith.mulf %21, %22 : vector<2x32xf32>
    %c0_8 = arith.constant 0 : index
    %c0_9 = arith.constant 0 : index
    %24 = vector.load %arg2[%c0_8, %c0_9] : memref<1x32xf32, #tpu.memory_space<vmem>>, vector<1x32xf32>
    %c0_10 = arith.constant 0 : index
    %c0_11 = arith.constant 0 : index
    %25 = vector.load %arg3[%c0_10, %c0_11] : memref<1x32xf32, #tpu.memory_space<vmem>>, vector<1x32xf32>
    %26 = vector.broadcast %24 : vector<1x32xf32> to vector<2x32xf32>
    %27 = arith.mulf %26, %23 : vector<2x32xf32>
    %28 = vector.broadcast %25 : vector<1x32xf32> to vector<2x32xf32>
    %29 = arith.addf %27, %28 : vector<2x32xf32>
    %c0_12 = arith.constant 0 : index
    %c0_13 = arith.constant 0 : index
    %30 = vector.load %arg4[%c0_12, %c0_13] : memref<2x32xf32, #tpu.memory_space<vmem>>, vector<2x32xf32>
    tpu.vector_store %arg4[%c0_12, %c0_13], %29 {strides = array<i32>} : memref<2x32xf32, #tpu.memory_space<vmem>>, vector<2x32xf32>,
    return
  }
  func.func @transform_0(%arg0: i32) -> (i32, i32) {
    %c0_i32 = arith.constant 0 : i32
    %c0_i32_0 = arith.constant 0 : i32
    return %arg0, %c0_i32 : i32, i32
  }
  func.func @transform_1(%arg0: i32) -> (i32, i32) {
    %c0_i32 = arith.constant 0 : i32
    %c0_i32_0 = arith.constant 0 : i32
    %c0_i32_1 = arith.constant 0 : i32
    return %c0_i32, %c0_i32_0 : i32, i32
  }
  func.func @transform_2(%arg0: i32) -> (i32, i32) {
    %c0_i32 = arith.constant 0 : i32
    %c0_i32_0 = arith.constant 0 : i32
    %c0_i32_1 = arith.constant 0 : i32
    return %c0_i32, %c0_i32_0 : i32, i32
  }
  func.func @transform_3(%arg0: i32) -> (i32, i32) {
    %c0_i32 = arith.constant 0 : i32
    %c0_i32_0 = arith.constant 0 : i32
    return %arg0, %c0_i32 : i32, i32
  }
}

</mosaic_0001>

<llo_original>
// kernel: tpu_custom_call.1
$region0: #{tpu_custom_call.1}
  #allocation0 [shape = 'u32[]', space=smem, size = 0x4, offset = 0x4, fixed_abs, tag = 'smem constant byte address 0x4 - core index']
  #allocation1 [shape = 'u32[72,128]{1,0:T(1,128)}', space=vmem, size = 0x9000, scoped, tag = 'internal scratch']
  %s0 = inlined_call_operand.hbm [shape: f32[2,32], index: 0, kind: input, shape index: {}]
  %s1 = inlined_call_operand.hbm [shape: f32[1,32], index: 1, kind: input, shape index: {}]
  %s2 = inlined_call_operand.vmem [shape: f32[1,32], index: 2, kind: input, shape index: {}]
  %s3 = inlined_call_operand.hbm [shape: f32[2,32], index: 3, kind: output, shape index: {}]
  %s4 = sld [smem:[#allocation0]]
  $region30: #{tpu_custom_call.1} parent=0
    _
  %s6 = ssub.s32 1, %s4
  %s7 = scalar_select 0, %s6, %s4
  $region1: #{tpu_custom_call.1} parent=0
    #allocation2 [shape = 'u8[1024]{0}', space=vmem, size = 0x400, scoped, tag = 'input window, operand 0, single buffered']
    #allocation3 [shape = 's32[1]{0}', space=sflag, size = 0x4, scoped, tag = 'scoped memory for tpu_custom_call.1']
    #allocation4 [shape = 's32[1]{0}', space=sflag, size = 0x4, scoped, tag = 'scoped memory for tpu_custom_call.1']
    #allocation5 [shape = 'u8[512]{0}', space=vmem, size = 0x400, scoped, tag = 'input window, operand 1, single buffered']
    #allocation6 [shape = 's32[1]{0}', space=sflag, size = 0x4, scoped, tag = 'scoped memory for tpu_custom_call.1']
    #allocation7 [shape = 'u8[1024]{0}', space=vmem, size = 0x400, scoped, tag = 'output window, operand 0, single buffered']
    %8 = vsyncpa [#allocation3], 0
    %9 = vsyncpa [#allocation6], 0
    %10 = vsyncpa [#allocation4], 0
    // Predicated region
    $region2: #{tpu_custom_call.1} parent=1 // pred_check
      _
    $region3: #{tpu_custom_call.1} parent=1 // pred_check_branch
      %12 = sbr.rel (0) target = $region5
    $region4: #{tpu_custom_call.1} parent=1 // pred_region
      %14 = vsyncadd [#allocation3], 0
      %s16 = sshll.u32 %s0, 4
      %s17 = int_to_ptr.hbm [resolvable:$true] %s16
      %s18 = sshll.u32 [#allocation2], 4
      %s19 = int_to_ptr.vmem [resolvable:$true] %s18
      %21 = dma.hbm_to_vmem [thread:$0]  %s17, 32, %s19, [#allocation3]
    $region5: #{tpu_custom_call.1} parent=1 // pred_fallthru
      _
    // Predicated region
    $region6: #{tpu_custom_call.1} parent=1 // pred_check
      _
    $region7: #{tpu_custom_call.1} parent=1 // pred_check_branch
      %23 = sbr.rel (0) target = $region9
    $region8: #{tpu_custom_call.1} parent=1 // pred_region
      %25 = vsyncadd [#allocation6], 0
      %s27 = sshll.u32 %s1, 4
      %s28 = int_to_ptr.hbm [resolvable:$true] %s27
      %s29 = sshll.u32 [#allocation5], 4
      %s30 = int_to_ptr.vmem [resolvable:$true] %s29
      %32 = dma.hbm_to_vmem [thread:$0]  %s28, 16, %s30, [#allocation6]
    $region9: #{tpu_custom_call.1} parent=1 // pred_fallthru
      _
    // Predicated region
    $region10: #{tpu_custom_call.1} parent=1 // pred_check
      _
    $region11: #{tpu_custom_call.1} parent=1 // pred_check_branch
      %34 = sbr.rel (0) target = $region13
    $region12: #{tpu_custom_call.1} parent=1 // pred_region
      _
    $region13: #{tpu_custom_call.1} parent=1 // pred_fallthru
      _
    // Predicated region
    $region14: #{tpu_custom_call.1} parent=1 // pred_check
      _
    $region15: #{tpu_custom_call.1} parent=1 // pred_check_branch
      %36 = sbr.rel (0) target = $region17
    $region16: #{tpu_custom_call.1} parent=1 // pred_region
      %38 = dma.done [#allocation3], 32
    $region17: #{tpu_custom_call.1} parent=1 // pred_fallthru
      _
    // Predicated region
    $region18: #{tpu_custom_call.1} parent=1 // pred_check
      _
    $region19: #{tpu_custom_call.1} parent=1 // pred_check_branch
      %40 = sbr.rel (0) target = $region21
    $region20: #{tpu_custom_call.1} parent=1 // pred_region
      %42 = dma.done [#allocation6], 16
    $region21: #{tpu_custom_call.1} parent=1 // pred_fallthru
      _
    %v43 = vld [vmem:[#allocation2] sm:$0x3]
    %vm44 = vcmask 254976
    %v45 = vsel %vm44, %v43, 0.0
    %46 = vadd.xlane.f32.xlu0 %v45
    %v47 = vpop.xlane.xlu0 %46
    %v48 = vmul.f32 %v43, %v43
    %v49 = vsel %vm44, %v48, 0.0
    %50 = vadd.xlane.f32.xlu0 %v49
    %v51 = vpop.xlane.xlu0 %50
    %v52 = vrcp.pop 32.0
    %v53 = vmul.f32 32.0, %v52
    %v54 = vsub.f32 1.0, %v53
    %v55 = vmul.f32 %v52, %v54
    %v56 = vadd.f32 %v52, %v55
    %vm57 = vweird.f32 %v52
    %v58 = vsel %vm57, %v52, %v56
    %v59 = vmul.f32 %v47, %v58
    %v60 = vmul.f32 %v59, 32.0
    %v61 = vmul.f32 %v60, %v59
    %v62 = vsub.f32 %v51, %v61
    %v63 = vrcp.pop 31.0
    %v64 = vmul.f32 31.0, %v63
    %v65 = vsub.f32 1.0, %v64
    %v66 = vmul.f32 %v63, %v65
    %v67 = vadd.f32 %v63, %v66
    %vm68 = vweird.f32 %v63
    %v69 = vsel %vm68, %v63, %v67
    %v70 = vmul.f32 %v62, %v69
    %v71 = vmax.f32 %v70, 0.0
    %v72 = vadd.f32 %v71, 1e-06
    %v73 = vrsqrt.pop %v72
    %v74 = vmul.f32 %v73, %v72
    %v75 = vmul.f32 %v74, %v73
    %v76 = vmul.f32 0.5, %v75
    %v77 = vsub.f32 1.5, %v76
    %v78 = vmul.f32 %v73, %v77
    %vm79 = vweird.f32 %v72
    %vm80 = vweird.f32 %v73
    %vm81 = vmor %vm79, %vm80
    %v82 = vsel %vm81, %v73, %v78
    %v83 = vsub.f32 %v43, %v59
    %v84 = vmul.f32 %v83, %v82
    %v85 = vld [vmem:[#allocation5] sm:$0x1]
    %v86 = vld [vmem:[%s2] sm:$0x1]
    %v88 = vperm.slane %v85, 0
    %v90 = vmul.f32 %v88, %v84
    %v92 = vperm.slane %v86, 0
    %v94 = vadd.f32 %v90, %v92
    %95 = vst.msk [vmem:[#allocation7] sm:$0x3] %vm44, %v94
    // Predicated region
    $region22: #{tpu_custom_call.1} parent=1 // pred_check
      _
    $region23: #{tpu_custom_call.1} parent=1 // pred_check_branch
      %97 = sbr.rel (0) target = $region25
    $region24: #{tpu_custom_call.1} parent=1 // pred_region
      %99 = vsyncadd [#allocation4], 0
      %s101 = sshll.u32 [#allocation7], 4
      %s102 = int_to_ptr.vmem [resolvable:$true] %s101
      %s103 = sshll.u32 %s3, 4
      %s104 = int_to_ptr.hbm [resolvable:$true] %s103
      %106 = dma.vmem_to_hbm [thread:$0]  %s102, 32, %s104, [#allocation4]
    $region25: #{tpu_custom_call.1} parent=1 // pred_fallthru
      _
    // Predicated region
    $region26: #{tpu_custom_call.1} parent=1 // pred_check
      _
    $region27: #{tpu_custom_call.1} parent=1 // pred_check_branch
      %108 = sbr.rel (0) target = $region29
    $region28: #{tpu_custom_call.1} parent=1 // pred_region
      %110 = dma.done [#allocation4], 32
    $region29: #{tpu_custom_call.1} parent=1 // pred_fallthru
      _
    %111 = vsyncpa [#allocation3], 1
    %112 = vsyncpa [#allocation6], 1
    %113 = vsyncpa [#allocation4], 1

</llo_original>
